<compile_context>
chip_gen: v7x
topology: tpu7x:2x2x1
jax: 0.10.0
libtpu: 0.0.40
codegen_flags: <defaults>
</compile_context>

<pallas_src>
from typing import NamedTuple

import jax
import jax.numpy as jnp
from jax.experimental import pallas as pl
from jax.experimental.pallas import tpu as pltpu


# v7x-safe scoped VMEM budget (v7x: 64 MiB physical / 32 MiB default scoped;
# v5e/v6e have more, so this is conservative everywhere).
_VMEM_LIMIT_BYTES = 32 * 1024 * 1024


# --------------------------------------------------------------------------
# Parameters
# --------------------------------------------------------------------------
class LFADQNParams(NamedTuple):
    weight_t: jnp.ndarray   # (D, A)   transpose of the PyTorch nn.Linear weight
    bias: jnp.ndarray       # (A,)
    w_aug_da: jnp.ndarray   # (D+1, A) weight with bias folded in (row-major kernel)
    w_aug_ad: jnp.ndarray   # (A, D+1) weight with bias folded in (feature-major kernel)


def prepare_params(weight_t, bias):
    """Fold the bias into the weight operand once, at parameter-prep time."""
    d, a = weight_t.shape
    w_aug_da = jnp.concatenate([weight_t, bias.reshape(1, a)], axis=0)
    w_aug_ad = jnp.concatenate([weight_t.T, bias.reshape(a, 1)], axis=1)
    return LFADQNParams(weight_t, bias, w_aug_da, w_aug_ad)


def init_lfa_dqn_params(key, input_dim, num_actions):
    """Deterministic init mimicking nn.Linear's U(-1/sqrt(in), 1/sqrt(in))."""
    kw, kb = jax.random.split(key)
    bound = 1.0 / jnp.sqrt(jnp.float32(input_dim))
    # PyTorch weight is (num_actions, input_dim); we keep its transpose.
    weight = jax.random.uniform(
        kw, (num_actions, input_dim), jnp.float32, -bound, bound
    )
    bias = jax.random.uniform(kb, (num_actions,), jnp.float32, -bound, bound)
    return prepare_params(weight.T, bias)


# --------------------------------------------------------------------------
# Tile sizing
# --------------------------------------------------------------------------
def _round_up(n, m):
    return ((n + m - 1) // m) * m


def _pick_tile(batch, block_b, align, target_steps=8):
    """Pick a batch tile giving a few large grid steps (>=2, prefer even)."""
    if batch <= align:
        return batch, 1
    tb = min(block_b, _round_up(pl.cdiv(batch, target_steps), align))
    tb = max(tb, align)
    steps = pl.cdiv(batch, tb)
    if steps < 2:
        # Ensure both v7x TensorCores get work under the "parallel" axis.
        tb = _round_up(pl.cdiv(batch, 2), align)
        steps = pl.cdiv(batch, tb)
    elif steps > 2 and steps % 2 == 1:
        # Best-effort nudge to an even step count for an even 2-TC split.
        tb = _round_up(pl.cdiv(batch, steps + 1), align)
        steps = pl.cdiv(batch, tb)
    return tb, steps


# --------------------------------------------------------------------------
# Kernels
# --------------------------------------------------------------------------
def _linear_rowmajor_kernel(x_ref, w_ref, o_ref):
    # x_ref: (tb, D) batch tile; w_ref: (D+1, A) weight with bias as last row;
    # o_ref: (tb, A)
    x = x_ref[...]
    w_aug = w_ref[...]
    d = x.shape[1]
    w = w_aug[:d, :]                    # (D, A)
    b = w_aug[d:, :]                    # (1, A) -> broadcasts over batch rows
    acc = jnp.dot(x, w, preferred_element_type=jnp.float32)
    o_ref[...] = (acc + b).astype(o_ref.dtype)


def _linear_featmajor_kernel(xt_ref, w_ref, o_ref):
    # xt_ref: (D, tb) lane-dense batch tile; w_ref: (A, D+1) with bias as last
    # column; o_ref: (A, tb).  Batch lives on the lane axis -> unmasked stores.
    xt = xt_ref[...]
    w_aug = w_ref[...]
    d = xt.shape[0]
    w = w_aug[:, :d]                    # (A, D)
    b = w_aug[:, d:]                    # (A, 1) -> broadcasts over batch lanes
    acc = jnp.dot(w, xt, preferred_element_type=jnp.float32)
    o_ref[...] = (acc + b).astype(o_ref.dtype)


# --------------------------------------------------------------------------
# Pallas wrappers
# --------------------------------------------------------------------------
def _forward_pallas_rowmajor(x, w_aug_da, block_b):
    B, D = x.shape
    A = w_aug_da.shape[1]
    tb, steps = _pick_tile(B, block_b, align=8)
    return pl.pallas_call(
        _linear_rowmajor_kernel,
        out_shape=jax.ShapeDtypeStruct((B, A), jnp.float32),
        grid=(steps,),
        in_specs=[
            pl.BlockSpec((tb, D), lambda i: (i, 0)),          # stream batch tiles
            pl.BlockSpec((D + 1, A), lambda i: (0, 0)),       # weight+bias resident
        ],
        out_specs=pl.BlockSpec((tb, A), lambda i: (i, 0)),
        compiler_params=pltpu.CompilerParams(
            dimension_semantics=("parallel",),                # v7x: split over 2 TCs
            vmem_limit_bytes=_VMEM_LIMIT_BYTES,
        ),
    )(x, w_aug_da)


def _forward_pallas_featmajor(x_t, w_aug_ad, block_b):
    D, B = x_t.shape
    A = w_aug_ad.shape[0]
    tb, steps = _pick_tile(B, block_b, align=128)             # lane-axis tiling
    return pl.pallas_call(
        _linear_featmajor_kernel,
        out_shape=jax.ShapeDtypeStruct((A, B), jnp.float32),
        grid=(steps,),
        in_specs=[
            pl.BlockSpec((D, tb), lambda i: (0, i)),          # lane-dense x tiles
            pl.BlockSpec((A, D + 1), lambda i: (0, 0)),       # weight+bias resident
        ],
        out_specs=pl.BlockSpec((A, tb), lambda i: (0, i)),    # lane-dense output
        compiler_params=pltpu.CompilerParams(
            dimension_semantics=("parallel",),
            vmem_limit_bytes=_VMEM_LIMIT_BYTES,
        ),
    )(x_t, w_aug_ad)


# --------------------------------------------------------------------------
# Public forward passes (module semantics: y = x @ W.T + b)
# --------------------------------------------------------------------------
def lfa_dqn_forward(x, params, *, block_b=65536, min_pallas_batch=32768):
    """Canonical interface: x (B, D) -> q-values (B, A).

    Below `min_pallas_batch` rows this dispatches to the fused XLA matmul
    (strictly faster at DQN-realistic sizes); above it, a batch-tiled Pallas
    kernel streams large row-major tiles.
    """
    B, D = x.shape
    assert D == params.weight_t.shape[0]
    if B < min_pallas_batch:
        return x @ params.weight_t + params.bias
    return _forward_pallas_rowmajor(x, params.w_aug_da, block_b)


def lfa_dqn_forward_feature_major(x_t, params, *, block_b=65536,
                                  min_pallas_batch=32768):
    """Lane-dense interface: x_t (D, B) -> q-values (A, B).

    Use this when the producer (e.g. replay buffer) can hand over observations
    feature-major; both the streamed operand and the output then have the long
    batch axis on lanes (contiguous DMA rows, unmasked stores).
    """
    D, B = x_t.shape
    assert D == params.weight_t.shape[0]
    if B < min_pallas_batch:
        return params.weight_t.T @ x_t + params.bias[:, None]
    return _forward_pallas_featmajor(x_t, params.w_aug_ad, block_b)


# --------------------------------------------------------------------------
# Demo / self-test
# --------------------------------------------------------------------------
if __name__ == "__main__":
    key = jax.random.PRNGKey(0)
    k_small, k_big, k_p = jax.random.split(key, 3)

    input_dim = 8      # Lunar Lander observation dim
    num_actions = 4    # Lunar Lander action space

    params = init_lfa_dqn_params(k_p, input_dim, num_actions)

    # 1) Module-realistic tiny batch: takes the fused-XLA dispatch path.
    x_small = jax.random.normal(k_small, (8, input_dim), jnp.float32)
    y_small = jax.block_until_ready(lfa_dqn_forward(x_small, params))
    ref_small = x_small @ params.weight_t + params.bias
    assert y_small.shape == (8, num_actions)
    assert jnp.allclose(y_small, ref_small, atol=1e-5, rtol=1e-5)

    # 2) Exercise both Pallas kernels (small shapes, forced past the dispatch
    #    threshold with small tiles so the grid has several steps).
    B = 1024
    x_big = jax.random.normal(k_big, (B, input_dim), jnp.float32)
    ref_big = x_big @ params.weight_t + params.bias

    # Row-major batch-tiled kernel.
    y_row = jax.block_until_ready(
        lfa_dqn_forward(x_big, params, block_b=256, min_pallas_batch=0))
    assert y_row.shape == (B, num_actions)
    assert jnp.allclose(y_row, ref_big, atol=1e-5, rtol=1e-5)

    # Lane-dense feature-major kernel (producer supplies x as (D, B)).
    x_big_t = jnp.asarray(x_big.T)
    y_feat = jax.block_until_ready(
        lfa_dqn_forward_feature_major(
            x_big_t, params, block_b=256, min_pallas_batch=0))
    assert y_feat.shape == (num_actions, B)
    assert jnp.allclose(y_feat, ref_big.T, atol=1e-5, rtol=1e-5)

    print("KERNEL_OK")
</pallas_src>

<mosaic_0001>
module attributes {stable_mosaic.version = 11 : i64} {
  func.func @_linear_rowmajor_kernel(%arg0: i32, %arg1: memref<128x8xf32, #tpu.memory_space<vmem>>, %arg2: memref<9x4xf32, #tpu.memory_space<vmem>>, %arg3: memref<128x4xf32, #tpu.memory_space<vmem>>) attributes {dimension_semantics = [#tpu.dimension_semantics<parallel>], iteration_bounds = array<i64: 8>, scalar_prefetch = 0 : i64, scratch_operands = 0 : i64, tpu.core_type = #tpu.core_type<tc>, window_params = [{transform_indices = @transform_0, window_bounds = array<i64: 128, 8>}, {pipeline_mode = #tpu.pipeline_mode<synchronous>, transform_indices = @transform_1, window_bounds = array<i64: 9, 4>}, {transform_indices = @transform_2, window_bounds = array<i64: 128, 4>}]} {
    %c0 = arith.constant 0 : index
    %c0_0 = arith.constant 0 : index
    %0 = vector.load %arg1[%c0, %c0_0] : memref<128x8xf32, #tpu.memory_space<vmem>>, vector<128x8xf32>
    %c0_1 = arith.constant 0 : index
    %c0_2 = arith.constant 0 : index
    %1 = vector.load %arg2[%c0_1, %c0_2] : memref<9x4xf32, #tpu.memory_space<vmem>>, vector<9x4xf32>
    %2 = vector.extract_strided_slice %1 {offsets = [0, 0], sizes = [8, 4], strides = [1, 1]} : vector<9x4xf32> to vector<8x4xf32>
    %3 = vector.extract_strided_slice %1 {offsets = [8, 0], sizes = [1, 4], strides = [1, 1]} : vector<9x4xf32> to vector<1x4xf32>
    %cst = arith.constant dense<0.000000e+00> : vector<128x4xf32>
    %4 = tpu.matmul %0, %2, %cst {dimension_numbers = #tpu.dot_dimension_numbers<[1], [0], [0], [1], [0, 0, 1, 1], [], []>} : vector<128x8xf32>, vector<8x4xf32>, vector<128x4xf32> -> vector<128x4xf32>
    %5 = vector.broadcast %3 : vector<1x4xf32> to vector<128x4xf32>
    %6 = arith.addf %4, %5 : vector<128x4xf32>
    %c0_3 = arith.constant 0 : index
    %c0_4 = arith.constant 0 : index
    %7 = vector.load %arg3[%c0_3, %c0_4] : memref<128x4xf32, #tpu.memory_space<vmem>>, vector<128x4xf32>
    tpu.vector_store %arg3[%c0_3, %c0_4], %6 {strides = array<i32>} : memref<128x4xf32, #tpu.memory_space<vmem>>, vector<128x4xf32>,
    return
  }
  func.func @transform_0(%arg0: i32) -> (i32, i32) {
    %c0_i32 = arith.constant 0 : i32
    %c0_i32_0 = arith.constant 0 : i32
    return %arg0, %c0_i32 : i32, i32
  }
  func.func @transform_1(%arg0: i32) -> (i32, i32) {
    %c0_i32 = arith.constant 0 : i32
    %c0_i32_0 = arith.constant 0 : i32
    %c0_i32_1 = arith.constant 0 : i32
    return %c0_i32, %c0_i32_0 : i32, i32
  }
  func.func @transform_2(%arg0: i32) -> (i32, i32) {
    %c0_i32 = arith.constant 0 : i32
    %c0_i32_0 = arith.constant 0 : i32
    return %arg0, %c0_i32 : i32, i32
  }
}

</mosaic_0001>

<llo_original>
// kernel: tpu_custom_call.1
$region0: #{tpu_custom_call.1}
  #allocation0 [shape = 'u32[]', space=smem, size = 0x4, offset = 0x4, fixed_abs, tag = 'smem constant byte address 0x4 - core index']
  #allocation1 [shape = 'u32[144,128]{1,0:T(1,128)}', space=vmem, size = 0x12000, scoped, tag = 'internal scratch']
  %s0 = inlined_call_operand.vmem [shape: f32[1024,8], index: 0, kind: input, shape index: {}]
  %s1 = inlined_call_operand.vmem [shape: f32[9,4], index: 1, kind: input, shape index: {}]
  %s2 = inlined_call_operand.vmem [shape: f32[1024,4], index: 2, kind: output, shape index: {}]
  %s3 = sld [smem:[#allocation0]]
  $region41: #{tpu_custom_call.1} parent=0
    _
  %s5 = ssub.s32 1, %s3
  %s6 = scalar_select 0, %s5, %s3
  loop: start=0, step=1, limit=10
  $region2: #{tpu_custom_call.1} parent=0 // loop_pre_header
    _
  $region3: #{tpu_custom_call.1} parent=0 // loop_header
    %s8 = sphi 0, %s12
    %p9 = scmp.ge.s32.totalorder %s8, 10
    %s18 = sphi 0, %s20
    %s21 = sphi 0, %s18
    %s22 = sphi 0, %s21
    %s38 = sphi 0, %s22
    %s42 = sphi 0, %s42
    %s44 = sphi 0, %s42
    %s45 = sphi 0, %s44
    %s59 = sphi 0, %s45
    %s65 = sphi 0, %s67
    %s68 = sphi 0, %s65
    %s69 = sphi 0, %s68
    %s85 = sphi 0, %s69
  $region4: #{tpu_custom_call.1} parent=0 // loop_header_branch
    %11 = sbr.rel (%p9) target = $region8
  $region5: #{tpu_custom_call.1} parent=0 // loop_body
    %s13 = ssub.s32 %s8, 1
    %s14 = ssub.s32 %s8, 2
    %s15 = sadd.s32 %s8, 1
    %s16 = ssub.s32 %s8, %s15
    %p17 = scmp.eq.s32.totalorder %s16, 0
    %s19 = sadd.s32 %s18, 1
    %s20 = scalar_select %p17, %s18, %s19
    %p23 = pneg %p17
    %p24 = scmp.eq.s32.totalorder %s8, 7
    %p25 = por %p23, %p24
    %p26 = scmp.ne.s32.totalorder %s18, %s21
    %p27 = scmp.eq.s32.totalorder %s8, 0
    %p28 = por %p26, %p27
    %p29 = scmp.ne.s32.totalorder %s18, %s21
    %p30 = scmp.eq.s32.totalorder %s13, 7
    %p31 = por %p29, %p30
    %p32 = scmp.ne.s32.totalorder %s21, %s22
    %p33 = scmp.eq.s32.totalorder %s13, 0
    %p34 = por %p32, %p33
    %p35 = scmp.ne.s32.totalorder %s21, %s22
    %p36 = scmp.eq.s32.totalorder %s14, 7
    %p37 = por %p35, %p36
    %p39 = scmp.ne.s32.totalorder %s22, %s38
    %p40 = scmp.eq.s32.totalorder %s14, 0
    %p41 = por %p39, %p40
    %s43 = sadd.s32 %s42, 1
    %p46 = scmp.eq.s32.totalorder %s8, 7
    %p47 = scmp.ne.s32.totalorder %s42, %s44
    %p48 = scmp.eq.s32.totalorder %s8, 0
    %p49 = por %p47, %p48
    %p50 = scmp.ne.s32.totalorder %s42, %s44
    %p51 = scmp.eq.s32.totalorder %s13, 7
    %p52 = por %p50, %p51
    %p53 = scmp.ne.s32.totalorder %s44, %s45
    %p54 = scmp.eq.s32.totalorder %s13, 0
    %p55 = por %p53, %p54
    %p56 = scmp.ne.s32.totalorder %s44, %s45
    %p57 = scmp.eq.s32.totalorder %s14, 7
    %p58 = por %p56, %p57
    %p60 = scmp.ne.s32.totalorder %s45, %s59
    %p61 = scmp.eq.s32.totalorder %s14, 0
    %p62 = por %p60, %p61
    %s63 = ssub.s32 %s8, %s15
    %p64 = scmp.eq.s32.totalorder %s63, 0
    %s66 = sadd.s32 %s65, 1
    %s67 = scalar_select %p64, %s65, %s66
    %p70 = pneg %p64
    %p71 = scmp.eq.s32.totalorder %s8, 7
    %p72 = por %p70, %p71
    %p73 = scmp.ne.s32.totalorder %s65, %s68
    %p74 = scmp.eq.s32.totalorder %s8, 0
    %p75 = por %p73, %p74
    %p76 = scmp.ne.s32.totalorder %s65, %s68
    %p77 = scmp.eq.s32.totalorder %s13, 7
    %p78 = por %p76, %p77
    %p79 = scmp.ne.s32.totalorder %s68, %s69
    %p80 = scmp.eq.s32.totalorder %s13, 0
    %p81 = por %p79, %p80
    %p82 = scmp.ne.s32.totalorder %s68, %s69
    %p83 = scmp.eq.s32.totalorder %s14, 7
    %p84 = por %p82, %p83
    %p86 = scmp.ne.s32.totalorder %s69, %s85
    %p87 = scmp.eq.s32.totalorder %s14, 0
    %p88 = por %p86, %p87
    %p89 = scmp.le.s32.totalorder 1, %s8
    %p90 = scmp.lt.s32.totalorder %s8, 9
    %p91 = pnand %p89, %p90
    %p92 = pneg %p91
    // Predicated region
    $region9: #{tpu_custom_call.1} parent=5 // pred_check
      _
    $region10: #{tpu_custom_call.1} parent=5 // pred_check_branch
      %94 = sbr.rel (%p91) target = $region12
    $region11: #{tpu_custom_call.1} parent=5 // pred_region
      %s95 = ssub.s32 %s8, 1
      // Predicated region
      $region13: #{tpu_custom_call.1} parent=11 // pred_check
        %p96 = pneg %p55
      $region14: #{tpu_custom_call.1} parent=11 // pred_check_branch
        %98 = sbr.rel (%p96) target = $region16
      $region15: #{tpu_custom_call.1} parent=11 // pred_region
        _
      $region16: #{tpu_custom_call.1} parent=11 // pred_fallthru
        _
    $region12: #{tpu_custom_call.1} parent=5 // pred_fallthru
      _
    %p99 = scmp.lt.s32.totalorder %s8, 8
    // Predicated region
    $region17: #{tpu_custom_call.1} parent=5 // pred_check
      %p100 = pneg %p99
    $region18: #{tpu_custom_call.1} parent=5 // pred_check_branch
      %102 = sbr.rel (%p100) target = $region20
    $region19: #{tpu_custom_call.1} parent=5 // pred_region
      // Predicated region
      $region21: #{tpu_custom_call.1} parent=19 // pred_check
        %p103 = pneg %p28
      $region22: #{tpu_custom_call.1} parent=19 // pred_check_branch
        %105 = sbr.rel (%p103) target = $region24
      $region23: #{tpu_custom_call.1} parent=19 // pred_region
        %s106 = smul.u32 16, %s8
        %p107 = scmp.lt.s32.totalorder %s106, 127
        %s108 = scalar_select %p107, %s106, 127
        %s109 = smul.addr %s108, 8
        %s110 = scalar_lea.vmem %s0, %s109
        %s111 = smul.u32 16, %s8
      $region24: #{tpu_custom_call.1} parent=19 // pred_fallthru
        _
    $region20: #{tpu_custom_call.1} parent=5 // pred_fallthru
      _
    %p112 = scmp.le.s32.totalorder 1, %s8
    %p113 = scmp.lt.s32.totalorder %s8, 9
    %p114 = pnand %p112, %p113
    %p115 = pneg %p114
    // Predicated region
    $region25: #{tpu_custom_call.1} parent=5 // pred_check
      _
    $region26: #{tpu_custom_call.1} parent=5 // pred_check_branch
      %117 = sbr.rel (%p114) target = $region28
    $region27: #{tpu_custom_call.1} parent=5 // pred_region
      %s118 = ssub.s32 %s8, 1
      %s119 = smul.u32 16, %s13
      %p120 = scmp.lt.s32.totalorder %s119, 127
      %s121 = scalar_select %p120, %s119, 127
      %s122 = smul.addr %s121, 8
      %s123 = scalar_lea.vmem %s0, %s122
      %p124 = pneg %p34
      %p125 = pneg %p31
      %p126 = pneg %p55
      %p127 = pneg %p52
      %p128 = pneg %p81
      %p129 = pneg %p78
      %s130 = smul.u32 16, %s13
      %p131 = scmp.lt.s32.totalorder %s130, 127
      %s132 = scalar_select %p131, %s130, 127
      %s133 = smul.addr %s132, 8
      %s134 = scalar_lea.vmem %s2, %s133
      %s135 = smul.u32 16, %s13
      %p136 = scmp.lt.s32.totalorder %s135, 127
      %s137 = scalar_select %p136, %s135, 127
      %s138 = smul.addr %s137, 8
      %s139 = scalar_lea.vmem %s0, %s138
      %s140 = smul.u32 16, %s13
      %s141 = smul.u32 16, %s13
      %p142 = scmp.lt.s32.totalorder %s141, 127
      %s143 = scalar_select %p142, %s141, 127
      %s144 = smul.addr %s143, 8
      %s145 = scalar_lea.vmem %s2, %s144
      %s146 = smul.u32 16, %s13
      %v147 = vld [vmem:[%s139] sm:$0xff]
      %v148 = vld [vmem:[%s139 + $0x8] sm:$0xff]
      %v149 = vld [vmem:[%s139 + $0x10] sm:$0xff]
      %v150 = vld [vmem:[%s139 + $0x18] sm:$0xff]
      %v151 = vld [vmem:[%s139 + $0x20] sm:$0xff]
      %v152 = vld [vmem:[%s139 + $0x28] sm:$0xff]
      %v153 = vld [vmem:[%s139 + $0x30] sm:$0xff]
      %v154 = vld [vmem:[%s139 + $0x38] sm:$0xff]
      %v155 = vld [vmem:[%s139 + $0x40] sm:$0xff]
      %v156 = vld [vmem:[%s139 + $0x48] sm:$0xff]
      %v157 = vld [vmem:[%s139 + $0x50] sm:$0xff]
      %v158 = vld [vmem:[%s139 + $0x58] sm:$0xff]
      %v159 = vld [vmem:[%s139 + $0x60] sm:$0xff]
      %v160 = vld [vmem:[%s139 + $0x68] sm:$0xff]
      %v161 = vld [vmem:[%s139 + $0x70] sm:$0xff]
      %v162 = vld [vmem:[%s139 + $0x78] sm:$0xff]
      %v163 = vld [vmem:[%s1] sm:$0xff]
      %v164 = vld [vmem:[%s1 + $0x8] sm:$0x1]
      %v165 = vlaneseq
      %v166 = vshrl.u32 %v165, 7
      %v167 = vsub.s32 0, %v166
      %v168 = vrot.slane %v164, %v167
      %vm169 = vcmask 64512
      %v171 = vsel %vm169, %v147, 0
      %v174 = vsel %vm169, %v148, 0
      %v177 = vsel %vm169, %v149, 0
      %v180 = vsel %vm169, %v150, 0
      %v183 = vsel %vm169, %v151, 0
      %v186 = vsel %vm169, %v152, 0
      %v189 = vsel %vm169, %v153, 0
      %v192 = vsel %vm169, %v154, 0
      %v195 = vsel %vm169, %v155, 0
      %v198 = vsel %vm169, %v156, 0
      %v201 = vsel %vm169, %v157, 0
      %v204 = vsel %vm169, %v158, 0
      %v207 = vsel %vm169, %v159, 0
      %v210 = vsel %vm169, %v160, 0
      %v213 = vsel %vm169, %v161, 0
      %v216 = vsel %vm169, %v162, 0
      %218 = vmatprep.subr.mxu0 0.0
      %219 = vmatpush1.msra.mxu0 %v163
      %220 = vmatprep.subr.mxu0 0.0
      %221 = vmatpush1.msra.mxu0 0.0
      %222 = vmatprep.subr.mxu0 0.0
      %223 = vmatpush1.msra.mxu0 0.0
      %224 = vmatprep.subr.mxu0 0.0
      %225 = vmatpush1.msra.mxu0 0.0
      %226 = vmatprep.subr.mxu0 0.0
      %227 = vmatpush1.msra.mxu0 0.0
      %228 = vmatprep.subr.mxu0 0.0
      %229 = vmatpush1.msra.mxu0 0.0
      %230 = vmatprep.subr.mxu0 0.0
      %231 = vmatpush1.msra.mxu0 0.0
      %232 = vmatprep.subr.mxu0 0.0
      %233 = vmatpush1.msra.mxu0 0.0
      %234 = vmatprep.subr.mxu0 0.0
      %235 = vmatpush1.msra.mxu0 0.0
      %236 = vmatprep.subr.mxu0 0.0
      %237 = vmatpush1.msra.mxu0 0.0
      %238 = vmatprep.subr.mxu0 0.0
      %239 = vmatpush1.msra.mxu0 0.0
      %240 = vmatprep.subr.mxu0 0.0
      %241 = vmatpush1.msra.mxu0 0.0
      %242 = vmatprep.subr.mxu0 0.0
      %243 = vmatpush1.msra.mxu0 0.0
      %244 = vmatprep.subr.mxu0 0.0
      %245 = vmatpush1.msra.mxu0 0.0
      %246 = vmatprep.subr.mxu0 0.0
      %247 = vmatpush1.msra.mxu0 0.0
      %248 = vmatprep.subr.mxu0 0.0
      %249 = vmatpush1.msra.mxu0 0.0
      %250 = vmatprep.subr.mxu0 0.0
      %251 = vmatpush1.msra.mxu0 0.0
      %252 = vmatprep.subr.mxu0 0.0
      %253 = vmatpush1.msra.mxu0 0.0
      %254 = vmatprep.subr.mxu0 0.0
      %255 = vmatpush1.msra.mxu0 0.0
      %256 = vmatprep.subr.mxu0 0.0
      %257 = vmatpush1.msra.mxu0 0.0
      %258 = vmatprep.subr.mxu0 0.0
      %259 = vmatpush1.msra.mxu0 0.0
      %260 = vmatprep.subr.mxu0 0.0
      %261 = vmatpush1.msra.mxu0 0.0
      %262 = vmatprep.subr.mxu0 0.0
      %263 = vmatpush1.msra.mxu0 0.0
      %264 = vmatprep.subr.mxu0 0.0
      %265 = vmatpush1.msra.mxu0 0.0
      %266 = vmatprep.subr.mxu0 0.0
      %267 = vmatpush1.msra.mxu0 0.0
      %268 = vmatprep.subr.mxu0 0.0
      %269 = vmatpush1.msra.mxu0 0.0
      %270 = vmatprep.subr.mxu0 0.0
      %271 = vmatpush1.msra.mxu0 0.0
      %272 = vmatprep.subr.mxu0 0.0
      %273 = vmatpush1.msra.mxu0 0.0
      %274 = vmatprep.subr.mxu0 0.0
      %275 = vmatpush1.msra.mxu0 0.0
      %276 = vmatprep.subr.mxu0 0.0
      %277 = vmatpush1.msra.mxu0 0.0
      %278 = vmatprep.subr.mxu0 0.0
      %279 = vmatpush1.msra.mxu0 0.0
      %280 = vmatprep.subr.mxu0 0.0
      %281 = vmatpush1.msra.mxu0 0.0
      %282 = vmatprep.mubr.f32.mxu0 0.0
      %283 = vmatmul.mubr.f32.gmra.mrb[0].mxu0 %v171
      %v284 = vpop.f32.mrb[0].mxu0
      %v285 = vadd.f32 %v168, %v284
      %v286 = vpop.f32.mrb[0].mxu0
      %287 = vmatprep.mubr.f32.mxu0 0.0
      %288 = vmatmul.mubr.f32.gmra.mrb[0].mxu0 %v174
      %v289 = vpop.f32.mrb[0].mxu0
      %v290 = vadd.f32 %v168, %v289
      %v291 = vpop.f32.mrb[0].mxu0
      %292 = vmatprep.mubr.f32.mxu0 0.0
      %293 = vmatmul.mubr.f32.gmra.mrb[0].mxu0 %v177
      %v294 = vpop.f32.mrb[0].mxu0
      %v295 = vadd.f32 %v168, %v294
      %v296 = vpop.f32.mrb[0].mxu0
      %297 = vmatprep.mubr.f32.mxu0 0.0
      %298 = vmatmul.mubr.f32.gmra.mrb[0].mxu0 %v180
      %v299 = vpop.f32.mrb[0].mxu0
      %v300 = vadd.f32 %v168, %v299
      %v301 = vpop.f32.mrb[0].mxu0
      %302 = vmatprep.mubr.f32.mxu0 0.0
      %303 = vmatmul.mubr.f32.gmra.mrb[0].mxu0 %v183
      %v304 = vpop.f32.mrb[0].mxu0
      %v305 = vadd.f32 %v168, %v304
      %v306 = vpop.f32.mrb[0].mxu0
      %307 = vmatprep.mubr.f32.mxu0 0.0
      %308 = vmatmul.mubr.f32.gmra.mrb[0].mxu0 %v186
      %v309 = vpop.f32.mrb[0].mxu0
      %v310 = vadd.f32 %v168, %v309
      %v311 = vpop.f32.mrb[0].mxu0
      %312 = vmatprep.mubr.f32.mxu0 0.0
      %313 = vmatmul.mubr.f32.gmra.mrb[0].mxu0 %v189
      %v314 = vpop.f32.mrb[0].mxu0
      %v315 = vadd.f32 %v168, %v314
      %v316 = vpop.f32.mrb[0].mxu0
      %317 = vmatprep.mubr.f32.mxu0 0.0
      %318 = vmatmul.mubr.f32.gmra.mrb[0].mxu0 %v192
      %v319 = vpop.f32.mrb[0].mxu0
      %v320 = vadd.f32 %v168, %v319
      %v321 = vpop.f32.mrb[0].mxu0
      %322 = vmatprep.mubr.f32.mxu0 0.0
      %323 = vmatmul.mubr.f32.gmra.mrb[0].mxu0 %v195
      %v324 = vpop.f32.mrb[0].mxu0
      %v325 = vadd.f32 %v168, %v324
      %v326 = vpop.f32.mrb[0].mxu0
      %327 = vmatprep.mubr.f32.mxu0 0.0
      %328 = vmatmul.mubr.f32.gmra.mrb[0].mxu0 %v198
      %v329 = vpop.f32.mrb[0].mxu0
      %v330 = vadd.f32 %v168, %v329
      %v331 = vpop.f32.mrb[0].mxu0
      %332 = vmatprep.mubr.f32.mxu0 0.0
      %333 = vmatmul.mubr.f32.gmra.mrb[0].mxu0 %v201
      %v334 = vpop.f32.mrb[0].mxu0
      %v335 = vadd.f32 %v168, %v334
      %v336 = vpop.f32.mrb[0].mxu0
      %337 = vmatprep.mubr.f32.mxu0 0.0
      %338 = vmatmul.mubr.f32.gmra.mrb[0].mxu0 %v204
      %v339 = vpop.f32.mrb[0].mxu0
      %v340 = vadd.f32 %v168, %v339
      %v341 = vpop.f32.mrb[0].mxu0
      %342 = vmatprep.mubr.f32.mxu0 0.0
      %343 = vmatmul.mubr.f32.gmra.mrb[0].mxu0 %v207
      %v344 = vpop.f32.mrb[0].mxu0
      %v345 = vadd.f32 %v168, %v344
      %v346 = vpop.f32.mrb[0].mxu0
      %347 = vmatprep.mubr.f32.mxu0 0.0
      %348 = vmatmul.mubr.f32.gmra.mrb[0].mxu0 %v210
      %v349 = vpop.f32.mrb[0].mxu0
      %v350 = vadd.f32 %v168, %v349
      %v351 = vpop.f32.mrb[0].mxu0
      %352 = vmatprep.mubr.f32.mxu0 0.0
      %353 = vmatmul.mubr.f32.gmra.mrb[0].mxu0 %v213
      %v354 = vpop.f32.mrb[0].mxu0
      %v355 = vadd.f32 %v168, %v354
      %v356 = vpop.f32.mrb[0].mxu0
      %357 = vmatprep.mubr.f32.mxu0 0.0
      %358 = vmatmul.mubr.f32.gmra.mrb[0].mxu0 %v216
      %v359 = vpop.f32.mrb[0].mxu0
      %v360 = vadd.f32 %v168, %v359
      %v361 = vpop.f32.mrb[0].mxu0
      %362 = vdwg.mxu0
      %vm363 = vcmask 31744
      %364 = vst.msk [vmem:[%s145] sm:$0xff] %vm363, %v285
      %365 = vst.msk [vmem:[%s145 + $0x8] sm:$0xff] %vm363, %v290
      %366 = vst.msk [vmem:[%s145 + $0x10] sm:$0xff] %vm363, %v295
      %367 = vst.msk [vmem:[%s145 + $0x18] sm:$0xff] %vm363, %v300
      %368 = vst.msk [vmem:[%s145 + $0x20] sm:$0xff] %vm363, %v305
      %369 = vst.msk [vmem:[%s145 + $0x28] sm:$0xff] %vm363, %v310
      %370 = vst.msk [vmem:[%s145 + $0x30] sm:$0xff] %vm363, %v315
      %371 = vst.msk [vmem:[%s145 + $0x38] sm:$0xff] %vm363, %v320
      %372 = vst.msk [vmem:[%s145 + $0x40] sm:$0xff] %vm363, %v325
      %373 = vst.msk [vmem:[%s145 + $0x48] sm:$0xff] %vm363, %v330
      %374 = vst.msk [vmem:[%s145 + $0x50] sm:$0xff] %vm363, %v335
      %375 = vst.msk [vmem:[%s145 + $0x58] sm:$0xff] %vm363, %v340
      %376 = vst.msk [vmem:[%s145 + $0x60] sm:$0xff] %vm363, %v345
      %377 = vst.msk [vmem:[%s145 + $0x68] sm:$0xff] %vm363, %v350
      %378 = vst.msk [vmem:[%s145 + $0x70] sm:$0xff] %vm363, %v355
      %379 = vst.msk [vmem:[%s145 + $0x78] sm:$0xff] %vm363, %v360
      %s380 = smul.u32 16, %s13
      %p381 = scmp.lt.s32.totalorder %s380, 127
      %s382 = scalar_select %p381, %s380, 127
      %s383 = smul.addr %s382, 8
      %s384 = scalar_lea.vmem %s2, %s383
      // Predicated region
      $region29: #{tpu_custom_call.1} parent=27 // pred_check
        %p385 = pneg %p78
      $region30: #{tpu_custom_call.1} parent=27 // pred_check_branch
        %387 = sbr.rel (%p385) target = $region32
      $region31: #{tpu_custom_call.1} parent=27 // pred_region
        %s388 = smul.u32 16, %s13
      $region32: #{tpu_custom_call.1} parent=27 // pred_fallthru
        _
    $region28: #{tpu_custom_call.1} parent=5 // pred_fallthru
      _
    %p389 = scmp.le.s32.totalorder 2, %s8
    // Predicated region
    $region33: #{tpu_custom_call.1} parent=5 // pred_check
      %p390 = pneg %p389
    $region34: #{tpu_custom_call.1} parent=5 // pred_check_branch
      %392 = sbr.rel (%p390) target = $region36
    $region35: #{tpu_custom_call.1} parent=5 // pred_region
      %s393 = ssub.s32 %s8, 2
      // Predicated region
      $region37: #{tpu_custom_call.1} parent=35 // pred_check
        %p394 = pneg %p84
      $region38: #{tpu_custom_call.1} parent=35 // pred_check_branch
        %396 = sbr.rel (%p394) target = $region40
      $region39: #{tpu_custom_call.1} parent=35 // pred_region
        %s397 = smul.u32 16, %s14
        %p398 = scmp.lt.s32.totalorder %s397, 127
        %s399 = scalar_select %p398, %s397, 127
        %s400 = smul.addr %s399, 8
        %s401 = scalar_lea.vmem %s2, %s400
      $region40: #{tpu_custom_call.1} parent=35 // pred_fallthru
        _
    $region36: #{tpu_custom_call.1} parent=5 // pred_fallthru
      _
  $region6: #{tpu_custom_call.1} parent=0 // loop_footer
    %s12 = sadd.s32 1, %s8
  $region7: #{tpu_custom_call.1} parent=0 // loop_footer_branch
    %7 = sbr.rel target = $region3
  $region8: #{tpu_custom_call.1} parent=0 // loop_exit
    _

</llo_original>
